<compile_context>
chip_gen: v7x
topology: tpu7x:2x2x1
jax: 0.10.0
libtpu: 0.0.40
codegen_flags: <defaults>
</compile_context>

<pallas_src>
import jax
import jax.numpy as jnp
from jax.experimental import pallas as pl
from jax.experimental.pallas import tpu as pltpu


def smooth_loss_kernel(cam_ref, depth_ref, halo_ref, mask_ref, out_ref):
    T, W = depth_ref.shape
    row0 = (pl.program_id(0) * T).astype(jnp.float32)   # global row of tile row 0

    depth = depth_ref[...]                 # (T, W) f32
    mask = mask_ref[...]                   # (T, W) f32 {0, 1}
    halo = halo_ref[...]                   # (2, W): depth rows row0-1 / row0+T (0 at edges)
    d_above = halo[0:1, :]                 # (1, W)
    d_below = halo[1:2, :]                 # (1, W)

    # Loop-invariant pieces, built once per tile and reused by all 3 channels.
    rows_i = jax.lax.broadcasted_iota(jnp.int32, (T, 1), 0)
    cols_i = jax.lax.broadcasted_iota(jnp.int32, (1, W), 1)
    xcol = cols_i.astype(jnp.float32)                     # pixel x
    yrow = rows_i.astype(jnp.float32) + row0              # global pixel y
    is_first_row = rows_i == 0
    is_last_row = rows_i == T - 1
    not_first_col = (cols_i != 0).astype(jnp.float32)     # f32 lane-edge masks
    not_last_col = (cols_i != W - 1).astype(jnp.float32)

    num = jnp.float32(0.0)
    for c in range(3):                                    # channels unrolled
        a = cam_ref[c, 0]                                 # SMEM scalar reads
        b = cam_ref[c, 1]
        d0 = cam_ref[c, 2]

        # Ray field regenerated in-kernel (2 FMAs / pixel) -- no p3d HBM read.
        ax = a * xcol                                     # (1, W)
        ray = ax + (b * yrow + d0)                        # (T, W)
        p = ray * depth                                   # (T, W)

        # Halo rows of p at global rows row0-1 / row0+T (zero depth at borders).
        p_abv = (ax + (b * (row0 - 1.0) + d0)) * d_above  # (1, W)
        p_blw = (ax + (b * (row0 + T) + d0)) * d_below    # (1, W)

        # Vertical 3-tap sum: sublane rolls (XLU) + boundary-row selects.
        up = pltpu.roll(p, shift=1, axis=0)               # row j <- p[j-1] (row 0 wraps)
        dn = pltpu.roll(p, shift=T - 1, axis=0)           # row j <- p[j+1] (row T-1 wraps)
        vsum = (p
                + jnp.where(is_first_row, p_abv, up)
                + jnp.where(is_last_row, p_blw, dn))

        # Horizontal 3-tap zero-padded sum: lane rolls (XLU) + f32 edge masks.
        lf = pltpu.roll(vsum, shift=1, axis=1)
        rt = pltpu.roll(vsum, shift=W - 1, axis=1)
        hsum = vsum + lf * not_first_col + rt * not_last_col

        res = p - hsum * (1.0 / 9.0)       # residual vs count_include_pad 3x3 mean
        num = num + jnp.sum(res * res * mask)

    # Lane-dense per-program partial sum (whole block filled with the scalar).
    out_ref[...] = jnp.full(out_ref.shape, num, jnp.float32)


def smooth_loss(depth, cam, mask, tile_rows=64):
    """depth: (H, W), cam: (3, 3) intrinsics, mask: (H, W) -> scalar masked MSE."""
    H, W = depth.shape
    depth = depth.astype(jnp.float32)
    mask = (mask > 0).astype(jnp.float32)
    cam_inv = jnp.linalg.inv(cam.astype(jnp.float32))       # rows = [a, b, d] per channel

    # Row-tile height: multiple of 8, at most ceil(H/8)*8.
    T = int(max(8, min(tile_rows, ((H + 7) // 8) * 8)))
    assert T % 8 == 0, "tile_rows must be a multiple of 8"
    n = (H + T - 1) // T
    H_pad = n * T
    pad = H_pad - H
    if pad:
        # Zero rows below the image behave exactly like the pool's zero padding
        # (depth 0 -> p 0) and contribute nothing to the masked sum (mask 0).
        depth_p = jnp.pad(depth, ((0, pad), (0, 0)))
        mask_p = jnp.pad(mask, ((0, pad), (0, 0)))
    else:
        depth_p, mask_p = depth, mask

    # One depth halo row above / below each tile (zeros at the image border),
    # so the vertical stencil never needs data from a neighbouring tile.
    dz = jnp.pad(depth_p, ((1, 1), (0, 0)))                  # (H_pad + 2, W)
    halo = jnp.stack([dz[0:H_pad:T], dz[T + 1:H_pad + 2:T]], axis=1)   # (n, 2, W)

    partials = pl.pallas_call(
        smooth_loss_kernel,
        out_shape=jax.ShapeDtypeStruct((n, 8, 128), jnp.float32),
        grid=(n,),
        in_specs=[
            pl.BlockSpec(memory_space=pltpu.MemorySpace.SMEM),    # cam_inv (3, 3) scalars
            pl.BlockSpec((T, W), lambda i: (i, 0)),               # depth row tile
            pl.BlockSpec((None, 2, W), lambda i: (i, 0, 0)),      # halo rows for tile i
            pl.BlockSpec((T, W), lambda i: (i, 0)),               # mask row tile
        ],
        out_specs=pl.BlockSpec((1, 8, 128), lambda i: (i, 0, 0)),
        compiler_params=pltpu.CompilerParams(
            dimension_semantics=("parallel",)),
    )(cam_inv, depth_p, halo, mask_p)

    num = jnp.sum(partials[:, 0, 0])
    den = 3.0 * jnp.sum(mask)          # nan for an all-zero mask (matches torch)
    return num / den


def reference_loss(depth, cam, mask):
    """Plain-JAX mirror of the torch module (zero-padded 3x3 mean, masked MSE)."""
    H, W = depth.shape
    cam_inv = jnp.linalg.inv(cam.astype(jnp.float32))
    yy, xx = jnp.meshgrid(jnp.arange(H, dtype=jnp.float32),
                          jnp.arange(W, dtype=jnp.float32), indexing="ij")
    p2d = jnp.stack([xx, yy, jnp.ones_like(xx)], axis=-1)            # (H, W, 3)
    p3d = jnp.einsum("ij,hwj->hwi", cam_inv, p2d)                    # (H, W, 3)
    p = p3d * depth[..., None]
    pp = jnp.pad(p, ((1, 1), (1, 1), (0, 0)))
    pooled = sum(pp[i:i + H, j:j + W] for i in range(3) for j in range(3)) / 9.0
    m = (mask > 0).astype(jnp.float32)[..., None]
    return jnp.sum((p - pooled) ** 2 * m) / (3.0 * jnp.sum(m[..., 0]))


if __name__ == "__main__":
    key = jax.random.PRNGKey(0)
    # Small stand-ins for nrows=424, ncols=512; exercise multi-tile rows,
    # multi-lane-tile columns, row padding (40 % 16 != 0) and single-tile cases.
    configs = [(40, 256, 16), (32, 128, 8), (16, 128, 16)]
    for (H, W, T) in configs:
        key, k1, k2 = jax.random.split(key, 3)
        depth = jax.random.uniform(k1, (H, W), jnp.float32, 0.5, 5.0)
        mask = (jax.random.uniform(k2, (H, W)) > 0.3).astype(jnp.float32)

        # Deterministic pinhole intrinsics (synthetic, not a checkpoint).
        fx, fy, cx, cy = 365.0, 365.0, W / 2.0, H / 2.0
        cam = jnp.array([[fx, 0.0, cx],
                         [0.0, fy, cy],
                         [0.0, 0.0, 1.0]], dtype=jnp.float32)

        loss = smooth_loss(depth, cam, mask, tile_rows=T)
        loss = jax.block_until_ready(loss)
        ref = reference_loss(depth, cam, mask)

        assert jnp.isfinite(loss), (H, W, float(loss))
        assert jnp.allclose(loss, ref, rtol=3e-4, atol=1e-6), \
            (H, W, float(loss), float(ref))
    print("KERNEL_OK")
</pallas_src>

<mosaic_0001>
module attributes {stable_mosaic.version = 11 : i64} {
  func.func @smooth_loss_kernel(%arg0: i32, %arg1: memref<3x3xf32, #tpu.memory_space<smem>>, %arg2: memref<16x256xf32, #tpu.memory_space<vmem>>, %arg3: memref<1x2x256xf32, #tpu.memory_space<vmem>>, %arg4: memref<16x256xf32, #tpu.memory_space<vmem>>, %arg5: memref<1x8x128xf32, #tpu.memory_space<vmem>>) attributes {dimension_semantics = [#tpu.dimension_semantics<parallel>], iteration_bounds = array<i64: 3>, scalar_prefetch = 0 : i64, scratch_operands = 0 : i64, tpu.core_type = #tpu.core_type<tc>, window_params = [{transform_indices = @transform_0, window_bounds = array<i64: 3, 3>}, {transform_indices = @transform_1, window_bounds = array<i64: 16, 256>}, {transform_indices = @transform_2, window_bounds = array<i64: 1, 2, 256>}, {transform_indices = @transform_3, window_bounds = array<i64: 16, 256>}, {transform_indices = @transform_4, window_bounds = array<i64: 1, 8, 128>}]} {
    %c16_i32 = arith.constant 16 : i32
    %0 = arith.muli %arg0, %c16_i32 : i32
    %1 = arith.sitofp %0 : i32 to f32
    %c0 = arith.constant 0 : index
    %c0_0 = arith.constant 0 : index
    %2 = vector.load %arg2[%c0, %c0_0] : memref<16x256xf32, #tpu.memory_space<vmem>>, vector<16x256xf32>
    %c0_1 = arith.constant 0 : index
    %c0_2 = arith.constant 0 : index
    %3 = vector.load %arg4[%c0_1, %c0_2] : memref<16x256xf32, #tpu.memory_space<vmem>>, vector<16x256xf32>
    %c0_3 = arith.constant 0 : index
    %c0_4 = arith.constant 0 : index
    %c0_5 = arith.constant 0 : index
    %4 = vector.load %arg3[%c0_3, %c0_4, %c0_5] : memref<1x2x256xf32, #tpu.memory_space<vmem>>, vector<1x2x256xf32>
    %5 = vector.shape_cast %4 : vector<1x2x256xf32> to vector<2x256xf32>
    %6 = vector.extract_strided_slice %5 {offsets = [0, 0], sizes = [1, 256], strides = [1, 1]} : vector<2x256xf32> to vector<1x256xf32>
    %7 = vector.extract_strided_slice %5 {offsets = [1, 0], sizes = [1, 256], strides = [1, 1]} : vector<2x256xf32> to vector<1x256xf32>
    %8 = tpu.iota {dimensions = array<i32: 0>} : vector<16x1xi32>
    %9 = tpu.iota {dimensions = array<i32: 1>} : vector<1x256xi32>
    %10 = arith.sitofp %9 : vector<1x256xi32> to vector<1x256xf32>
    %11 = arith.sitofp %8 : vector<16x1xi32> to vector<16x1xf32>
    %12 = vector.broadcast %1 : f32 to vector<16x1xf32>
    %13 = arith.addf %11, %12 : vector<16x1xf32>
    %c0_i32 = arith.constant 0 : i32
    %14 = vector.broadcast %c0_i32 : i32 to vector<16x1xi32>
    %15 = arith.cmpi eq, %8, %14 : vector<16x1xi32>
    %c15_i32 = arith.constant 15 : i32
    %16 = vector.broadcast %c15_i32 : i32 to vector<16x1xi32>
    %17 = arith.cmpi eq, %8, %16 : vector<16x1xi32>
    %c0_i32_6 = arith.constant 0 : i32
    %18 = vector.broadcast %c0_i32_6 : i32 to vector<1x256xi32>
    %19 = arith.cmpi ne, %9, %18 : vector<1x256xi32>
    %20 = arith.extui %19 : vector<1x256xi1> to vector<1x256xi32>
    %21 = arith.sitofp %20 : vector<1x256xi32> to vector<1x256xf32>
    %c255_i32 = arith.constant 255 : i32
    %22 = vector.broadcast %c255_i32 : i32 to vector<1x256xi32>
    %23 = arith.cmpi ne, %9, %22 : vector<1x256xi32>
    %24 = arith.extui %23 : vector<1x256xi1> to vector<1x256xi32>
    %25 = arith.sitofp %24 : vector<1x256xi32> to vector<1x256xf32>
    %c0_7 = arith.constant 0 : index
    %c0_8 = arith.constant 0 : index
    %26 = memref.load %arg1[%c0_7, %c0_8] : memref<3x3xf32, #tpu.memory_space<smem>>
    %c0_9 = arith.constant 0 : index
    %c1 = arith.constant 1 : index
    %27 = memref.load %arg1[%c0_9, %c1] : memref<3x3xf32, #tpu.memory_space<smem>>
    %c0_10 = arith.constant 0 : index
    %c2 = arith.constant 2 : index
    %28 = memref.load %arg1[%c0_10, %c2] : memref<3x3xf32, #tpu.memory_space<smem>>
    %29 = vector.broadcast %26 : f32 to vector<1x256xf32>
    %30 = arith.mulf %29, %10 : vector<1x256xf32>
    %31 = vector.broadcast %27 : f32 to vector<16x1xf32>
    %32 = arith.mulf %31, %13 : vector<16x1xf32>
    %33 = vector.broadcast %28 : f32 to vector<16x1xf32>
    %34 = arith.addf %32, %33 : vector<16x1xf32>
    %35 = vector.broadcast %30 : vector<1x256xf32> to vector<16x256xf32>
    %36 = vector.broadcast %34 : vector<16x1xf32> to vector<16x256xf32>
    %37 = arith.addf %35, %36 : vector<16x256xf32>
    %38 = arith.mulf %37, %2 : vector<16x256xf32>
    %cst = arith.constant 1.000000e+00 : f32
    %39 = arith.subf %1, %cst : f32
    %40 = arith.mulf %27, %39 : f32
    %41 = arith.addf %40, %28 : f32
    %42 = vector.broadcast %41 : f32 to vector<1x256xf32>
    %43 = arith.addf %30, %42 : vector<1x256xf32>
    %44 = arith.mulf %43, %6 : vector<1x256xf32>
    %cst_11 = arith.constant 1.600000e+01 : f32
    %45 = arith.addf %1, %cst_11 : f32
    %46 = arith.mulf %27, %45 : f32
    %47 = arith.addf %46, %28 : f32
    %48 = vector.broadcast %47 : f32 to vector<1x256xf32>
    %49 = arith.addf %30, %48 : vector<1x256xf32>
    %50 = arith.mulf %49, %7 : vector<1x256xf32>
    %c1_i32 = arith.constant 1 : i32
    %51 = tpu.dynamic_rotate %38 by %c1_i32 dim 0 : vector<16x256xf32>, i32 -> vector<16x256xf32>
    %c15_i32_12 = arith.constant 15 : i32
    %52 = tpu.dynamic_rotate %38 by %c15_i32_12 dim 0 : vector<16x256xf32>, i32 -> vector<16x256xf32>
    %53 = vector.shape_cast %15 : vector<16x1xi1> to vector<16x1xi1>
    %54 = vector.broadcast %53 : vector<16x1xi1> to vector<16x256xi1>
    %55 = vector.shape_cast %44 : vector<1x256xf32> to vector<1x256xf32>
    %56 = vector.broadcast %55 : vector<1x256xf32> to vector<16x256xf32>
    %57 = arith.select %54, %56, %51 : vector<16x256xi1>, vector<16x256xf32>
    %58 = arith.addf %38, %57 : vector<16x256xf32>
    %59 = vector.shape_cast %17 : vector<16x1xi1> to vector<16x1xi1>
    %60 = vector.broadcast %59 : vector<16x1xi1> to vector<16x256xi1>
    %61 = vector.shape_cast %50 : vector<1x256xf32> to vector<1x256xf32>
    %62 = vector.broadcast %61 : vector<1x256xf32> to vector<16x256xf32>
    %63 = arith.select %60, %62, %52 : vector<16x256xi1>, vector<16x256xf32>
    %64 = arith.addf %58, %63 : vector<16x256xf32>
    %c1_i32_13 = arith.constant 1 : i32
    %65 = tpu.dynamic_rotate %64 by %c1_i32_13 dim 1 : vector<16x256xf32>, i32 -> vector<16x256xf32>
    %c255_i32_14 = arith.constant 255 : i32
    %66 = tpu.dynamic_rotate %64 by %c255_i32_14 dim 1 : vector<16x256xf32>, i32 -> vector<16x256xf32>
    %67 = vector.broadcast %21 : vector<1x256xf32> to vector<16x256xf32>
    %68 = arith.mulf %65, %67 : vector<16x256xf32>
    %69 = arith.addf %64, %68 : vector<16x256xf32>
    %70 = vector.broadcast %25 : vector<1x256xf32> to vector<16x256xf32>
    %71 = arith.mulf %66, %70 : vector<16x256xf32>
    %72 = arith.addf %69, %71 : vector<16x256xf32>
    %cst_15 = arith.constant 0.111111112 : f32
    %73 = vector.broadcast %cst_15 : f32 to vector<16x256xf32>
    %74 = arith.mulf %72, %73 : vector<16x256xf32>
    %75 = arith.subf %38, %74 : vector<16x256xf32>
    %76 = arith.mulf %75, %75 : vector<16x256xf32>
    %77 = arith.mulf %76, %3 : vector<16x256xf32>
    %78 = vector.shape_cast %77 : vector<16x256xf32> to vector<1x16x256xf32>
    %cst_16 = arith.constant dense<0.000000e+00> : vector<1xf32>
    %79 = vector.multi_reduction <add>, %78, %cst_16 [1, 2] : vector<1x16x256xf32> to vector<1xf32>
    %80 = vector.shape_cast %79 : vector<1xf32> to vector<1x1x1xf32>
    %81 = vector.extract %80[0, 0, 0] : f32 from vector<1x1x1xf32>
    %cst_17 = arith.constant 0.000000e+00 : f32
    %82 = arith.addf %cst_17, %81 : f32
    %c1_18 = arith.constant 1 : index
    %c0_19 = arith.constant 0 : index
    %83 = memref.load %arg1[%c1_18, %c0_19] : memref<3x3xf32, #tpu.memory_space<smem>>
    %c1_20 = arith.constant 1 : index
    %c1_21 = arith.constant 1 : index
    %84 = memref.load %arg1[%c1_20, %c1_21] : memref<3x3xf32, #tpu.memory_space<smem>>
    %c1_22 = arith.constant 1 : index
    %c2_23 = arith.constant 2 : index
    %85 = memref.load %arg1[%c1_22, %c2_23] : memref<3x3xf32, #tpu.memory_space<smem>>
    %86 = vector.broadcast %83 : f32 to vector<1x256xf32>
    %87 = arith.mulf %86, %10 : vector<1x256xf32>
    %88 = vector.broadcast %84 : f32 to vector<16x1xf32>
    %89 = arith.mulf %88, %13 : vector<16x1xf32>
    %90 = vector.broadcast %85 : f32 to vector<16x1xf32>
    %91 = arith.addf %89, %90 : vector<16x1xf32>
    %92 = vector.broadcast %87 : vector<1x256xf32> to vector<16x256xf32>
    %93 = vector.broadcast %91 : vector<16x1xf32> to vector<16x256xf32>
    %94 = arith.addf %92, %93 : vector<16x256xf32>
    %95 = arith.mulf %94, %2 : vector<16x256xf32>
    %cst_24 = arith.constant 1.000000e+00 : f32
    %96 = arith.subf %1, %cst_24 : f32
    %97 = arith.mulf %84, %96 : f32
    %98 = arith.addf %97, %85 : f32
    %99 = vector.broadcast %98 : f32 to vector<1x256xf32>
    %100 = arith.addf %87, %99 : vector<1x256xf32>
    %101 = arith.mulf %100, %6 : vector<1x256xf32>
    %cst_25 = arith.constant 1.600000e+01 : f32
    %102 = arith.addf %1, %cst_25 : f32
    %103 = arith.mulf %84, %102 : f32
    %104 = arith.addf %103, %85 : f32
    %105 = vector.broadcast %104 : f32 to vector<1x256xf32>
    %106 = arith.addf %87, %105 : vector<1x256xf32>
    %107 = arith.mulf %106, %7 : vector<1x256xf32>
    %c1_i32_26 = arith.constant 1 : i32
    %108 = tpu.dynamic_rotate %95 by %c1_i32_26 dim 0 : vector<16x256xf32>, i32 -> vector<16x256xf32>
    %c15_i32_27 = arith.constant 15 : i32
    %109 = tpu.dynamic_rotate %95 by %c15_i32_27 dim 0 : vector<16x256xf32>, i32 -> vector<16x256xf32>
    %110 = vector.shape_cast %15 : vector<16x1xi1> to vector<16x1xi1>
    %111 = vector.broadcast %110 : vector<16x1xi1> to vector<16x256xi1>
    %112 = vector.shape_cast %101 : vector<1x256xf32> to vector<1x256xf32>
    %113 = vector.broadcast %112 : vector<1x256xf32> to vector<16x256xf32>
    %114 = arith.select %111, %113, %108 : vector<16x256xi1>, vector<16x256xf32>
    %115 = arith.addf %95, %114 : vector<16x256xf32>
    %116 = vector.shape_cast %17 : vector<16x1xi1> to vector<16x1xi1>
    %117 = vector.broadcast %116 : vector<16x1xi1> to vector<16x256xi1>
    %118 = vector.shape_cast %107 : vector<1x256xf32> to vector<1x256xf32>
    %119 = vector.broadcast %118 : vector<1x256xf32> to vector<16x256xf32>
    %120 = arith.select %117, %119, %109 : vector<16x256xi1>, vector<16x256xf32>
    %121 = arith.addf %115, %120 : vector<16x256xf32>
    %c1_i32_28 = arith.constant 1 : i32
    %122 = tpu.dynamic_rotate %121 by %c1_i32_28 dim 1 : vector<16x256xf32>, i32 -> vector<16x256xf32>
    %c255_i32_29 = arith.constant 255 : i32
    %123 = tpu.dynamic_rotate %121 by %c255_i32_29 dim 1 : vector<16x256xf32>, i32 -> vector<16x256xf32>
    %124 = vector.broadcast %21 : vector<1x256xf32> to vector<16x256xf32>
    %125 = arith.mulf %122, %124 : vector<16x256xf32>
    %126 = arith.addf %121, %125 : vector<16x256xf32>
    %127 = vector.broadcast %25 : vector<1x256xf32> to vector<16x256xf32>
    %128 = arith.mulf %123, %127 : vector<16x256xf32>
    %129 = arith.addf %126, %128 : vector<16x256xf32>
    %cst_30 = arith.constant 0.111111112 : f32
    %130 = vector.broadcast %cst_30 : f32 to vector<16x256xf32>
    %131 = arith.mulf %129, %130 : vector<16x256xf32>
    %132 = arith.subf %95, %131 : vector<16x256xf32>
    %133 = arith.mulf %132, %132 : vector<16x256xf32>
    %134 = arith.mulf %133, %3 : vector<16x256xf32>
    %135 = vector.shape_cast %134 : vector<16x256xf32> to vector<1x16x256xf32>
    %cst_31 = arith.constant dense<0.000000e+00> : vector<1xf32>
    %136 = vector.multi_reduction <add>, %135, %cst_31 [1, 2] : vector<1x16x256xf32> to vector<1xf32>
    %137 = vector.shape_cast %136 : vector<1xf32> to vector<1x1x1xf32>
    %138 = vector.extract %137[0, 0, 0] : f32 from vector<1x1x1xf32>
    %139 = arith.addf %82, %138 : f32
    %c2_32 = arith.constant 2 : index
    %c0_33 = arith.constant 0 : index
    %140 = memref.load %arg1[%c2_32, %c0_33] : memref<3x3xf32, #tpu.memory_space<smem>>
    %c2_34 = arith.constant 2 : index
    %c1_35 = arith.constant 1 : index
    %141 = memref.load %arg1[%c2_34, %c1_35] : memref<3x3xf32, #tpu.memory_space<smem>>
    %c2_36 = arith.constant 2 : index
    %c2_37 = arith.constant 2 : index
    %142 = memref.load %arg1[%c2_36, %c2_37] : memref<3x3xf32, #tpu.memory_space<smem>>
    %143 = vector.broadcast %140 : f32 to vector<1x256xf32>
    %144 = arith.mulf %143, %10 : vector<1x256xf32>
    %145 = vector.broadcast %141 : f32 to vector<16x1xf32>
    %146 = arith.mulf %145, %13 : vector<16x1xf32>
    %147 = vector.broadcast %142 : f32 to vector<16x1xf32>
    %148 = arith.addf %146, %147 : vector<16x1xf32>
    %149 = vector.broadcast %144 : vector<1x256xf32> to vector<16x256xf32>
    %150 = vector.broadcast %148 : vector<16x1xf32> to vector<16x256xf32>
    %151 = arith.addf %149, %150 : vector<16x256xf32>
    %152 = arith.mulf %151, %2 : vector<16x256xf32>
    %cst_38 = arith.constant 1.000000e+00 : f32
    %153 = arith.subf %1, %cst_38 : f32
    %154 = arith.mulf %141, %153 : f32
    %155 = arith.addf %154, %142 : f32
    %156 = vector.broadcast %155 : f32 to vector<1x256xf32>
    %157 = arith.addf %144, %156 : vector<1x256xf32>
    %158 = arith.mulf %157, %6 : vector<1x256xf32>
    %cst_39 = arith.constant 1.600000e+01 : f32
    %159 = arith.addf %1, %cst_39 : f32
    %160 = arith.mulf %141, %159 : f32
    %161 = arith.addf %160, %142 : f32
    %162 = vector.broadcast %161 : f32 to vector<1x256xf32>
    %163 = arith.addf %144, %162 : vector<1x256xf32>
    %164 = arith.mulf %163, %7 : vector<1x256xf32>
    %c1_i32_40 = arith.constant 1 : i32
    %165 = tpu.dynamic_rotate %152 by %c1_i32_40 dim 0 : vector<16x256xf32>, i32 -> vector<16x256xf32>
    %c15_i32_41 = arith.constant 15 : i32
    %166 = tpu.dynamic_rotate %152 by %c15_i32_41 dim 0 : vector<16x256xf32>, i32 -> vector<16x256xf32>
    %167 = vector.shape_cast %15 : vector<16x1xi1> to vector<16x1xi1>
    %168 = vector.broadcast %167 : vector<16x1xi1> to vector<16x256xi1>
    %169 = vector.shape_cast %158 : vector<1x256xf32> to vector<1x256xf32>
    %170 = vector.broadcast %169 : vector<1x256xf32> to vector<16x256xf32>
    %171 = arith.select %168, %170, %165 : vector<16x256xi1>, vector<16x256xf32>
    %172 = arith.addf %152, %171 : vector<16x256xf32>
    %173 = vector.shape_cast %17 : vector<16x1xi1> to vector<16x1xi1>
    %174 = vector.broadcast %173 : vector<16x1xi1> to vector<16x256xi1>
    %175 = vector.shape_cast %164 : vector<1x256xf32> to vector<1x256xf32>
    %176 = vector.broadcast %175 : vector<1x256xf32> to vector<16x256xf32>
    %177 = arith.select %174, %176, %166 : vector<16x256xi1>, vector<16x256xf32>
    %178 = arith.addf %172, %177 : vector<16x256xf32>
    %c1_i32_42 = arith.constant 1 : i32
    %179 = tpu.dynamic_rotate %178 by %c1_i32_42 dim 1 : vector<16x256xf32>, i32 -> vector<16x256xf32>
    %c255_i32_43 = arith.constant 255 : i32
    %180 = tpu.dynamic_rotate %178 by %c255_i32_43 dim 1 : vector<16x256xf32>, i32 -> vector<16x256xf32>
    %181 = vector.broadcast %21 : vector<1x256xf32> to vector<16x256xf32>
    %182 = arith.mulf %179, %181 : vector<16x256xf32>
    %183 = arith.addf %178, %182 : vector<16x256xf32>
    %184 = vector.broadcast %25 : vector<1x256xf32> to vector<16x256xf32>
    %185 = arith.mulf %180, %184 : vector<16x256xf32>
    %186 = arith.addf %183, %185 : vector<16x256xf32>
    %cst_44 = arith.constant 0.111111112 : f32
    %187 = vector.broadcast %cst_44 : f32 to vector<16x256xf32>
    %188 = arith.mulf %186, %187 : vector<16x256xf32>
    %189 = arith.subf %152, %188 : vector<16x256xf32>
    %190 = arith.mulf %189, %189 : vector<16x256xf32>
    %191 = arith.mulf %190, %3 : vector<16x256xf32>
    %192 = vector.shape_cast %191 : vector<16x256xf32> to vector<1x16x256xf32>
    %cst_45 = arith.constant dense<0.000000e+00> : vector<1xf32>
    %193 = vector.multi_reduction <add>, %192, %cst_45 [1, 2] : vector<1x16x256xf32> to vector<1xf32>
    %194 = vector.shape_cast %193 : vector<1xf32> to vector<1x1x1xf32>
    %195 = vector.extract %194[0, 0, 0] : f32 from vector<1x1x1xf32>
    %196 = arith.addf %139, %195 : f32
    %197 = vector.broadcast %196 : f32 to vector<1x8x128xf32>
    %c0_46 = arith.constant 0 : index
    %c0_47 = arith.constant 0 : index
    %c0_48 = arith.constant 0 : index
    %198 = vector.load %arg5[%c0_46, %c0_47, %c0_48] : memref<1x8x128xf32, #tpu.memory_space<vmem>>, vector<1x8x128xf32>
    tpu.vector_store %arg5[%c0_46, %c0_47, %c0_48], %197 {strides = array<i32>} : memref<1x8x128xf32, #tpu.memory_space<vmem>>, vector<1x8x128xf32>,
    return
  }
  func.func @transform_0(%arg0: i32) -> (i32, i32) {
    %c0_i32 = arith.constant 0 : i32
    %c0_i32_0 = arith.constant 0 : i32
    %c0_i32_1 = arith.constant 0 : i32
    return %c0_i32, %c0_i32_0 : i32, i32
  }
  func.func @transform_1(%arg0: i32) -> (i32, i32) {
    %c0_i32 = arith.constant 0 : i32
    %c0_i32_0 = arith.constant 0 : i32
    return %arg0, %c0_i32 : i32, i32
  }
  func.func @transform_2(%arg0: i32) -> (i32, i32, i32) {
    %c0_i32 = arith.constant 0 : i32
    %c0_i32_0 = arith.constant 0 : i32
    %c0_i32_1 = arith.constant 0 : i32
    return %arg0, %c0_i32, %c0_i32_0 : i32, i32, i32
  }
  func.func @transform_3(%arg0: i32) -> (i32, i32) {
    %c0_i32 = arith.constant 0 : i32
    %c0_i32_0 = arith.constant 0 : i32
    return %arg0, %c0_i32 : i32, i32
  }
  func.func @transform_4(%arg0: i32) -> (i32, i32, i32) {
    %c0_i32 = arith.constant 0 : i32
    %c0_i32_0 = arith.constant 0 : i32
    %c0_i32_1 = arith.constant 0 : i32
    return %arg0, %c0_i32, %c0_i32_0 : i32, i32, i32
  }
}

</mosaic_0001>

<llo_original>
// kernel: tpu_custom_call.1
$region0: #{tpu_custom_call.1}
  #allocation0 [shape = 'u32[]', space=smem, size = 0x4, offset = 0x4, fixed_abs, tag = 'smem constant byte address 0x4 - core index']
  #allocation1 [shape = 'u32[144,128]{1,0:T(1,128)}', space=vmem, size = 0x12000, scoped, tag = 'internal scratch']
  %s0 = inlined_call_operand.hbm [shape: f32[3,3], index: 0, kind: input, shape index: {}]
  %s1 = inlined_call_operand.hbm [shape: f32[48,256], index: 1, kind: input, shape index: {}]
  %s2 = inlined_call_operand.hbm [shape: f32[3,2,256], index: 2, kind: input, shape index: {}]
  %s3 = inlined_call_operand.hbm [shape: f32[48,256], index: 3, kind: input, shape index: {}]
  %s4 = inlined_call_operand.hbm [shape: f32[3,8,128], index: 4, kind: output, shape index: {}]
  %s5 = sld [smem:[#allocation0]]
  $region65: #{tpu_custom_call.1} parent=0
    _
  %s7 = ssub.s32 1, %s5
  %s8 = scalar_select 0, %s7, %s5
  $region1: #{tpu_custom_call.1} parent=0
    #allocation2 [shape = 'u8[2048]{0}', space=smem, size = 0x800, scoped, tag = 'input window, operand 0, single buffered']
    #allocation3 [shape = 's32[2]{0}', space=sflag, size = 0x8, scoped, tag = 'scoped memory for tpu_custom_call.1']
    #allocation4 [shape = 's32[2]{0}', space=sflag, size = 0x8, scoped, tag = 'scoped memory for tpu_custom_call.1']
    #allocation5 [shape = 's32[2]{0}', space=sflag, size = 0x8, scoped, tag = 'scoped memory for tpu_custom_call.1']
    #allocation6 [shape = 'u8[32768]{0}', space=vmem, size = 0x8000, scoped, tag = 'input window, operand 1']
    #allocation7 [shape = 'u8[4096]{0}', space=vmem, size = 0x1000, scoped, tag = 'input window, operand 2']
    #allocation8 [shape = 's32[2]{0}', space=sflag, size = 0x8, scoped, tag = 'scoped memory for tpu_custom_call.1']
    #allocation9 [shape = 'u8[32768]{0}', space=vmem, size = 0x8000, scoped, tag = 'input window, operand 3']
    #allocation10 [shape = 'u8[8192]{0}', space=vmem, size = 0x2000, scoped, tag = 'output window, operand 0']
    %9 = vsyncpa [#allocation5], 0
    %10 = vsyncpa [#allocation3], 0
    %s11 = scalar_lea.sflag [#allocation3], 1
    %12 = vsyncpa %s11, 0
    %13 = vsyncpa [#allocation8], 0
    %s14 = scalar_lea.sflag [#allocation8], 1
    %15 = vsyncpa %s14, 0
    %16 = vsyncpa [#allocation4], 0
    %s17 = scalar_lea.sflag [#allocation4], 1
    %18 = vsyncpa %s17, 0
    loop: start=0, step=1, limit=5
    $region2: #{tpu_custom_call.1} parent=1 // loop_pre_header
      _
    $region3: #{tpu_custom_call.1} parent=1 // loop_header
      %s20 = sphi 0, %s24
      %p21 = scmp.ge.s32.totalorder %s20, 5
      %s28 = sphi 0, %s28
      %s30 = sphi 0, %s28
      %s31 = sphi 0, %s30
      %s45 = sphi 0, %s31
      %s51 = sphi 0, %s53
      %s54 = sphi 0, %s51
      %s55 = sphi 0, %s54
      %s71 = sphi 0, %s55
      %s77 = sphi 0, %s79
      %s80 = sphi 0, %s77
      %s81 = sphi 0, %s80
      %s97 = sphi 0, %s81
      %s103 = sphi 0, %s105
      %s106 = sphi 0, %s103
      %s107 = sphi 0, %s106
      %s123 = sphi 0, %s107
      %s129 = sphi 0, %s131
      %s132 = sphi 0, %s129
      %s133 = sphi 0, %s132
      %s149 = sphi 0, %s133
    $region4: #{tpu_custom_call.1} parent=1 // loop_header_branch
      %23 = sbr.rel (%p21) target = $region8
    $region5: #{tpu_custom_call.1} parent=1 // loop_body
      %s25 = ssub.s32 %s20, 1
      %s26 = ssub.s32 %s20, 2
      %s27 = sadd.s32 %s20, 1
      %s29 = sadd.s32 %s28, 1
      %p32 = scmp.eq.s32.totalorder %s20, 2
      %p33 = scmp.ne.s32.totalorder %s28, %s30
      %p34 = scmp.eq.s32.totalorder %s20, 0
      %p35 = por %p33, %p34
      %p36 = scmp.ne.s32.totalorder %s28, %s30
      %p37 = scmp.eq.s32.totalorder %s25, 2
      %p38 = por %p36, %p37
      %p39 = scmp.ne.s32.totalorder %s30, %s31
      %p40 = scmp.eq.s32.totalorder %s25, 0
      %p41 = por %p39, %p40
      %p42 = scmp.ne.s32.totalorder %s30, %s31
      %p43 = scmp.eq.s32.totalorder %s26, 2
      %p44 = por %p42, %p43
      %p46 = scmp.ne.s32.totalorder %s31, %s45
      %p47 = scmp.eq.s32.totalorder %s26, 0
      %p48 = por %p46, %p47
      %s49 = ssub.s32 %s20, %s27
      %p50 = scmp.eq.s32.totalorder %s49, 0
      %s52 = sadd.s32 %s51, 1
      %s53 = scalar_select %p50, %s51, %s52
      %p56 = pneg %p50
      %p57 = scmp.eq.s32.totalorder %s20, 2
      %p58 = por %p56, %p57
      %p59 = scmp.ne.s32.totalorder %s51, %s54
      %p60 = scmp.eq.s32.totalorder %s20, 0
      %p61 = por %p59, %p60
      %p62 = scmp.ne.s32.totalorder %s51, %s54
      %p63 = scmp.eq.s32.totalorder %s25, 2
      %p64 = por %p62, %p63
      %p65 = scmp.ne.s32.totalorder %s54, %s55
      %p66 = scmp.eq.s32.totalorder %s25, 0
      %p67 = por %p65, %p66
      %p68 = scmp.ne.s32.totalorder %s54, %s55
      %p69 = scmp.eq.s32.totalorder %s26, 2
      %p70 = por %p68, %p69
      %p72 = scmp.ne.s32.totalorder %s55, %s71
      %p73 = scmp.eq.s32.totalorder %s26, 0
      %p74 = por %p72, %p73
      %s75 = ssub.s32 %s20, %s27
      %p76 = scmp.eq.s32.totalorder %s75, 0
      %s78 = sadd.s32 %s77, 1
      %s79 = scalar_select %p76, %s77, %s78
      %p82 = pneg %p76
      %p83 = scmp.eq.s32.totalorder %s20, 2
      %p84 = por %p82, %p83
      %p85 = scmp.ne.s32.totalorder %s77, %s80
      %p86 = scmp.eq.s32.totalorder %s20, 0
      %p87 = por %p85, %p86
      %p88 = scmp.ne.s32.totalorder %s77, %s80
      %p89 = scmp.eq.s32.totalorder %s25, 2
      %p90 = por %p88, %p89
      %p91 = scmp.ne.s32.totalorder %s80, %s81
      %p92 = scmp.eq.s32.totalorder %s25, 0
      %p93 = por %p91, %p92
      %p94 = scmp.ne.s32.totalorder %s80, %s81
      %p95 = scmp.eq.s32.totalorder %s26, 2
      %p96 = por %p94, %p95
      %p98 = scmp.ne.s32.totalorder %s81, %s97
      %p99 = scmp.eq.s32.totalorder %s26, 0
      %p100 = por %p98, %p99
      %s101 = ssub.s32 %s20, %s27
      %p102 = scmp.eq.s32.totalorder %s101, 0
      %s104 = sadd.s32 %s103, 1
      %s105 = scalar_select %p102, %s103, %s104
      %p108 = pneg %p102
      %p109 = scmp.eq.s32.totalorder %s20, 2
      %p110 = por %p108, %p109
      %p111 = scmp.ne.s32.totalorder %s103, %s106
      %p112 = scmp.eq.s32.totalorder %s20, 0
      %p113 = por %p111, %p112
      %p114 = scmp.ne.s32.totalorder %s103, %s106
      %p115 = scmp.eq.s32.totalorder %s25, 2
      %p116 = por %p114, %p115
      %p117 = scmp.ne.s32.totalorder %s106, %s107
      %p118 = scmp.eq.s32.totalorder %s25, 0
      %p119 = por %p117, %p118
      %p120 = scmp.ne.s32.totalorder %s106, %s107
      %p121 = scmp.eq.s32.totalorder %s26, 2
      %p122 = por %p120, %p121
      %p124 = scmp.ne.s32.totalorder %s107, %s123
      %p125 = scmp.eq.s32.totalorder %s26, 0
      %p126 = por %p124, %p125
      %s127 = ssub.s32 %s20, %s27
      %p128 = scmp.eq.s32.totalorder %s127, 0
      %s130 = sadd.s32 %s129, 1
      %s131 = scalar_select %p128, %s129, %s130
      %p134 = pneg %p128
      %p135 = scmp.eq.s32.totalorder %s20, 2
      %p136 = por %p134, %p135
      %p137 = scmp.ne.s32.totalorder %s129, %s132
      %p138 = scmp.eq.s32.totalorder %s20, 0
      %p139 = por %p137, %p138
      %p140 = scmp.ne.s32.totalorder %s129, %s132
      %p141 = scmp.eq.s32.totalorder %s25, 2
      %p142 = por %p140, %p141
      %p143 = scmp.ne.s32.totalorder %s132, %s133
      %p144 = scmp.eq.s32.totalorder %s25, 0
      %p145 = por %p143, %p144
      %p146 = scmp.ne.s32.totalorder %s132, %s133
      %p147 = scmp.eq.s32.totalorder %s26, 2
      %p148 = por %p146, %p147
      %p150 = scmp.ne.s32.totalorder %s133, %s149
      %p151 = scmp.eq.s32.totalorder %s26, 0
      %p152 = por %p150, %p151
      %p153 = scmp.le.s32.totalorder 1, %s20
      %p154 = scmp.lt.s32.totalorder %s20, 4
      %p155 = pnand %p153, %p154
      %p156 = pneg %p155
      // Predicated region
      $region9: #{tpu_custom_call.1} parent=5 // pred_check
        _
      $region10: #{tpu_custom_call.1} parent=5 // pred_check_branch
        %158 = sbr.rel (%p155) target = $region12
      $region11: #{tpu_custom_call.1} parent=5 // pred_region
        %s159 = ssub.s32 %s20, 1
        // Predicated region
        $region13: #{tpu_custom_call.1} parent=11 // pred_check
          %p160 = pneg %p41
        $region14: #{tpu_custom_call.1} parent=11 // pred_check_branch
          %162 = sbr.rel (%p160) target = $region16
        $region15: #{tpu_custom_call.1} parent=11 // pred_region
          %s164 = ssub.s32 64, 64
          %165 = vsyncadd [#allocation5], %s164
          %168 = dma.hbm_to_smem %s0, 64, [#allocation2], [#allocation5]
        $region16: #{tpu_custom_call.1} parent=11 // pred_fallthru
          _
      $region12: #{tpu_custom_call.1} parent=5 // pred_fallthru
        _
      %p169 = scmp.lt.s32.totalorder %s20, 3
      // Predicated region
      $region17: #{tpu_custom_call.1} parent=5 // pred_check
        %p170 = pneg %p169
      $region18: #{tpu_custom_call.1} parent=5 // pred_check_branch
        %172 = sbr.rel (%p170) target = $region20
      $region19: #{tpu_custom_call.1} parent=5 // pred_region
        // Predicated region
        $region21: #{tpu_custom_call.1} parent=19 // pred_check
          %p173 = pneg %p61
        $region22: #{tpu_custom_call.1} parent=19 // pred_check_branch
          %175 = sbr.rel (%p173) target = $region24
        $region23: #{tpu_custom_call.1} parent=19 // pred_region
          %s176 = sand.u32 %s51, 1
          %s177 = scalar_lea.sflag [#allocation3], %s176
          %s178 = sand.u32 %s51, 1
          %s179 = smul.addr %s178, 32
          %s180 = scalar_lea.vmem [#allocation6], %s179
          %s181 = smul.u32 2, %s20
          %s183 = ssub.s32 512, 512
          %184 = vsyncadd %s177, %s183
          %s185 = smul.addr %s181, 2
          %s186 = smul.addr %s185, 128
          %s187 = scalar_lea.hbm %s1, %s186
          %s188 = sshll.u32 %s180, 4
          %s189 = int_to_ptr.vmem [resolvable:$true] %s188
          %194 = dma.hbm_to_vmem [thread:$0]  %s187, 512, %s189, %s177, 256, 256, 16
        $region24: #{tpu_custom_call.1} parent=19 // pred_fallthru
          _
        // Predicated region
        $region25: #{tpu_custom_call.1} parent=19 // pred_check
          %p195 = pneg %p87
        $region26: #{tpu_custom_call.1} parent=19 // pred_check_branch
          %197 = sbr.rel (%p195) target = $region28
        $region27: #{tpu_custom_call.1} parent=19 // pred_region
          %s198 = sand.u32 %s20, 1
          %s199 = scalar_lea.sflag [#allocation8], %s198
          %s200 = sand.u32 %s77, 1
          %s201 = smul.addr %s200, 4
          %s202 = scalar_lea.vmem [#allocation7], %s201
          %s204 = ssub.s32 64, 64
          %205 = vsyncadd %s199, %s204
          %s206 = smul.addr %s20, 2
          %s207 = smul.addr %s206, 32
          %s208 = scalar_lea.hbm %s2, %s207
          %s210 = sshll.u32 %s202, 4
          %s211 = int_to_ptr.vmem [resolvable:$true] %s210
          %213 = dma.hbm_to_vmem [thread:$0]  %s208, 64, %s211, %s199
        $region28: #{tpu_custom_call.1} parent=19 // pred_fallthru
          _
        // Predicated region
        $region29: #{tpu_custom_call.1} parent=19 // pred_check
          %p214 = pneg %p113
        $region30: #{tpu_custom_call.1} parent=19 // pred_check_branch
          %216 = sbr.rel (%p214) target = $region32
        $region31: #{tpu_custom_call.1} parent=19 // pred_region
          %s217 = sand.u32 %s20, 1
          %s218 = scalar_lea.sflag [#allocation8], %s217
          %s219 = sand.u32 %s103, 1
          %s220 = smul.addr %s219, 32
          %s221 = scalar_lea.vmem [#allocation9], %s220
          %s222 = smul.u32 2, %s20
          %s224 = ssub.s32 512, 512
          %225 = vsyncadd %s218, %s224
          %s226 = smul.addr %s222, 2
          %s227 = smul.addr %s226, 128
          %s228 = scalar_lea.hbm %s3, %s227
          %s229 = sshll.u32 %s221, 4
          %s230 = int_to_ptr.vmem [resolvable:$true] %s229
          %235 = dma.hbm_to_vmem [thread:$0]  %s228, 512, %s230, %s218, 256, 256, 16
        $region32: #{tpu_custom_call.1} parent=19 // pred_fallthru
          _
      $region20: #{tpu_custom_call.1} parent=5 // pred_fallthru
        _
      %p236 = scmp.le.s32.totalorder 1, %s20
      %p237 = scmp.lt.s32.totalorder %s20, 4
      %p238 = pnand %p236, %p237
      %p239 = pneg %p238
      // Predicated region
      $region33: #{tpu_custom_call.1} parent=5 // pred_check
        _
      $region34: #{tpu_custom_call.1} parent=5 // pred_check_branch
        %241 = sbr.rel (%p238) target = $region36
      $region35: #{tpu_custom_call.1} parent=5 // pred_region
        %s242 = ssub.s32 %s20, 1
        // Predicated region
        $region37: #{tpu_custom_call.1} parent=35 // pred_check
          %p243 = pneg %p41
        $region38: #{tpu_custom_call.1} parent=35 // pred_check_branch
          %245 = sbr.rel (%p243) target = $region40
        $region39: #{tpu_custom_call.1} parent=35 // pred_region
          %246 = dma.done [#allocation5], 64
        $region40: #{tpu_custom_call.1} parent=35 // pred_fallthru
          _
        %s247 = sand.u32 %s54, 1
        %s248 = scalar_lea.sflag [#allocation3], %s247
        %s249 = sand.u32 %s54, 1
        %s250 = smul.addr %s249, 32
        %s251 = scalar_lea.vmem [#allocation6], %s250
        // Predicated region
        $region41: #{tpu_custom_call.1} parent=35 // pred_check
          %p252 = pneg %p67
        $region42: #{tpu_custom_call.1} parent=35 // pred_check_branch
          %254 = sbr.rel (%p252) target = $region44
        $region43: #{tpu_custom_call.1} parent=35 // pred_region
          %255 = dma.done %s248, 512
        $region44: #{tpu_custom_call.1} parent=35 // pred_fallthru
          _
        %s256 = sand.u32 %s25, 1
        %s257 = scalar_lea.sflag [#allocation8], %s256
        %s258 = sand.u32 %s80, 1
        %s259 = smul.addr %s258, 4
        %s260 = scalar_lea.vmem [#allocation7], %s259
        // Predicated region
        $region45: #{tpu_custom_call.1} parent=35 // pred_check
          %p261 = pneg %p93
        $region46: #{tpu_custom_call.1} parent=35 // pred_check_branch
          %263 = sbr.rel (%p261) target = $region48
        $region47: #{tpu_custom_call.1} parent=35 // pred_region
          %264 = dma.done %s257, 64
        $region48: #{tpu_custom_call.1} parent=35 // pred_fallthru
          _
        %s265 = sand.u32 %s25, 1
        %s266 = scalar_lea.sflag [#allocation8], %s265
        %s267 = sand.u32 %s106, 1
        %s268 = smul.addr %s267, 32
        %s269 = scalar_lea.vmem [#allocation9], %s268
        // Predicated region
        $region49: #{tpu_custom_call.1} parent=35 // pred_check
          %p270 = pneg %p119
        $region50: #{tpu_custom_call.1} parent=35 // pred_check_branch
          %272 = sbr.rel (%p270) target = $region52
        $region51: #{tpu_custom_call.1} parent=35 // pred_region
          %273 = dma.done %s266, 512
        $region52: #{tpu_custom_call.1} parent=35 // pred_fallthru
          _
        %274 = sfence
        %p275 = pneg %p41
        %p276 = pneg %p38
        %s277 = sand.u32 %s54, 1
        %s278 = scalar_lea.sflag [#allocation3], %s277
        %s279 = sand.u32 %s54, 1
        %s280 = smul.addr %s279, 32
        %s281 = scalar_lea.vmem [#allocation6], %s280
        %p282 = pneg %p67
        %p283 = pneg %p64
        %s284 = sand.u32 %s25, 1
        %s285 = scalar_lea.sflag [#allocation8], %s284
        %s286 = sand.u32 %s80, 1
        %s287 = smul.addr %s286, 4
        %s288 = scalar_lea.vmem [#allocation7], %s287
        %p289 = pneg %p93
        %p290 = pneg %p90
        %s291 = sand.u32 %s25, 1
        %s292 = scalar_lea.sflag [#allocation8], %s291
        %s293 = sand.u32 %s106, 1
        %s294 = smul.addr %s293, 32
        %s295 = scalar_lea.vmem [#allocation9], %s294
        %p296 = pneg %p119
        %p297 = pneg %p116
        %p298 = pneg %p145
        %p299 = pneg %p142
        %s300 = sand.u32 %s132, 1
        %s301 = scalar_lea.sflag [#allocation4], %s300
        %s302 = sand.u32 %s132, 1
        %s303 = smul.addr %s302, 8
        %s304 = scalar_lea.vmem [#allocation10], %s303
        %s305 = smul.u32 2, %s25
        %s306 = smul.u32 2, %s25
        %s307 = smul.u32 %s25, 16
        %s308 = scvt.s32.f32 %s307
        %v309 = vld [vmem:[%s251] sm:$0xff]
        %v310 = vld [vmem:[%s251 + $0x8] sm:$0xff]
        %v311 = vld [vmem:[%s251 + $0x10] sm:$0xff]
        %v312 = vld [vmem:[%s251 + $0x18] sm:$0xff]
        %v313 = vld [vmem:[%s269] sm:$0xff]
        %v314 = vld [vmem:[%s269 + $0x8] sm:$0xff]
        %v315 = vld [vmem:[%s269 + $0x10] sm:$0xff]
        %v316 = vld [vmem:[%s269 + $0x18] sm:$0xff]
        %v317 = vld [vmem:[%s260] sm:$0xf]
        %v318 = vlaneseq
        %v319 = vshrl.u32 %v318, 7
        %v320 = vadd.s32 %v319, 8
        %v321 = vlaneseq
        %v322 = vand.u32 %v321, 127
        %v323 = vadd.s32 %v322, 128
        %v324 = vcvt.s32.f32 %v322
        %v325 = vcvt.s32.f32 %v323
        %v326 = vcvt.s32.f32 %v319
        %v327 = vcvt.s32.f32 %v320
        %v328 = vstv %s308
        %v329 = vadd.f32 %v326, %v328
        %v330 = vadd.f32 %v327, %v328
        %vm331 = vcmp.eq.s32.totalorder %v319, 0
        %vm332 = vcmp.eq.s32.totalorder %v320, 0
        %vm333 = vcmp.eq.s32.totalorder %v319, 15
        %vm334 = vcmp.eq.s32.totalorder %v320, 15
        %vm335 = vcmp.ne.s32.totalorder %v322, 0
        %vm336 = vcmp.ne.s32.totalorder %v323, 0
        %v337 = vsel %vm335, 1, 0
        %v338 = vsel %vm336, 1, 0
        %v339 = vcvt.s32.f32 %v337
        %v340 = vcvt.s32.f32 %v338
        %vm341 = vcmp.ne.s32.totalorder %v322, 255
        %vm342 = vcmp.ne.s32.totalorder %v323, 255
        %v343 = vsel %vm341, 1, 0
        %v344 = vsel %vm342, 1, 0
        %v345 = vcvt.s32.f32 %v343
        %v346 = vcvt.s32.f32 %v344
        %s347 = sld [smem:[#allocation2]]
        %s348 = sld [smem:[#allocation2 + $0x1]]
        %s349 = sld [smem:[#allocation2 + $0x2]]
        %v350 = vstv %s347
        %v351 = vmul.f32 %v350, %v324
        %v352 = vmul.f32 %v350, %v325
        %v353 = vstv %s348
        %v354 = vmul.f32 %v353, %v329
        %v355 = vmul.f32 %v353, %v330
        %v356 = vstv %s349
        %v357 = vadd.f32 %v354, %v356
        %v358 = vadd.f32 %v355, %v356
        %v359 = vadd.f32 %v351, %v357
        %v360 = vadd.f32 %v352, %v357
        %v361 = vadd.f32 %v351, %v358
        %v362 = vadd.f32 %v352, %v358
        %v363 = vmul.f32 %v359, %v309
        %v364 = vmul.f32 %v360, %v310
        %v365 = vmul.f32 %v361, %v311
        %v366 = vmul.f32 %v362, %v312
        %s367 = ssub.f32 %s308, 1.0
        %s368 = smul.f32 %s348, %s367
        %s369 = sadd.f32 %s368, %s349
        %v370 = vstv %s369
        %v371 = vadd.f32 %v351, %v370
        %v372 = vadd.f32 %v352, %v370
        %v374 = vlaneseq
        %v375 = vshrl.u32 %v374, 7
        %v376 = vsub.s32 0, %v375
        %v377 = vrot.slane %v317, %v376
        %v378 = vlaneseq
        %v379 = vshrl.u32 %v378, 7
        %v380 = vsub.s32 2, %v379
        %v381 = vrot.slane %v317, %v380
        %v384 = vmul.f32 %v371, %v377
        %v385 = vmul.f32 %v372, %v381
        %s386 = sadd.f32 %s308, 16.0
        %s387 = smul.f32 %s348, %s386
        %s388 = sadd.f32 %s387, %s349
        %v389 = vstv %s388
        %v390 = vadd.f32 %v351, %v389
        %v391 = vadd.f32 %v352, %v389
        %v392 = vlaneseq
        %v393 = vshrl.u32 %v392, 7
        %v394 = vsub.s32 1, %v393
        %v395 = vrot.slane %v317, %v394
        %v396 = vlaneseq
        %v397 = vshrl.u32 %v396, 7
        %v398 = vsub.s32 3, %v397
        %v399 = vrot.slane %v317, %v398
        %v402 = vmul.f32 %v390, %v395
        %v403 = vmul.f32 %v391, %v399
        %v404 = vrot.slane %v363, 7
        %v405 = vrot.slane %v364, 7
        %v406 = vrot.slane %v365, 7
        %v407 = vrot.slane %v366, 7
        %vm408 = vcmp.lt.s32.totalorder %v319, 1
        %v409 = vsel %vm408, %v404, %v406
        %v410 = vsel %vm408, %v405, %v407
        %v411 = vsel %vm408, %v406, %v404
        %v412 = vsel %vm408, %v407, %v405
        %v413 = vrot.slane %v363, 1
        %v414 = vrot.slane %v364, 1
        %v415 = vrot.slane %v365, 1
        %v416 = vrot.slane %v366, 1
        %vm417 = vcmp.lt.s32.totalorder %v319, 7
        %v418 = vsel %vm417, %v413, %v415
        %v419 = vsel %vm417, %v414, %v416
        %v420 = vsel %vm417, %v415, %v413
        %v421 = vsel %vm417, %v416, %v414
        %v422 = vsel %vm331, 1, 0
        %v423 = vsel %vm332, 1, 0
        %vm424 = vcmp.eq.s32.totalorder %v422, 1
        %vm425 = vcmp.eq.s32.totalorder %v423, 1
        %v426 = vlaneseq
        %v427 = vshrl.u32 %v426, 7
        %v428 = vsub.s32 0, %v427
        %v429 = vrot.slane %v384, %v428
        %v430 = vlaneseq
        %v431 = vshrl.u32 %v430, 7
        %v432 = vsub.s32 0, %v431
        %v433 = vrot.slane %v385, %v432
        %v434 = vsel %vm424, %v429, %v411
        %v435 = vsel %vm424, %v433, %v412
        %v436 = vsel %vm425, %v429, %v409
        %v437 = vsel %vm425, %v433, %v410
        %v438 = vadd.f32 %v363, %v434
        %v439 = vadd.f32 %v364, %v435
        %v440 = vadd.f32 %v365, %v436
        %v441 = vadd.f32 %v366, %v437
        %v442 = vsel %vm333, 1, 0
        %v443 = vsel %vm334, 1, 0
        %vm444 = vcmp.eq.s32.totalorder %v442, 1
        %vm445 = vcmp.eq.s32.totalorder %v443, 1
        %v446 = vlaneseq
        %v447 = vshrl.u32 %v446, 7
        %v448 = vsub.s32 0, %v447
        %v449 = vrot.slane %v402, %v448
        %v450 = vlaneseq
        %v451 = vshrl.u32 %v450, 7
        %v452 = vsub.s32 0, %v451
        %v453 = vrot.slane %v403, %v452
        %v454 = vsel %vm444, %v449, %v418
        %v455 = vsel %vm444, %v453, %v419
        %v456 = vsel %vm445, %v449, %v420
        %v457 = vsel %vm445, %v453, %v421
        %v458 = vadd.f32 %v438, %v454
        %v459 = vadd.f32 %v439, %v455
        %v460 = vadd.f32 %v440, %v456
        %v461 = vadd.f32 %v441, %v457
        %462 = vrot.lane.b32.xlu0 %v458, 1
        %v463 = vpop.permute.xlu0 %462
        %464 = vrot.lane.b32.xlu0 %v460, 1
        %v465 = vpop.permute.xlu0 %464
        %466 = vrot.lane.b32.xlu0 %v459, 1
        %v467 = vpop.permute.xlu0 %466
        %468 = vrot.lane.b32.xlu0 %v461, 1
        %v469 = vpop.permute.xlu0 %468
        %vm470 = vcmp.lt.s32.totalorder %v322, 1
        %v471 = vsel %vm470, %v463, %v467
        %v472 = vsel %vm470, %v465, %v469
        %v473 = vsel %vm470, %v467, %v463
        %v474 = vsel %vm470, %v469, %v465
        %475 = vrot.lane.b32.xlu0 %v458, 127
        %v476 = vpop.permute.xlu0 %475
        %477 = vrot.lane.b32.xlu0 %v460, 127
        %v478 = vpop.permute.xlu0 %477
        %479 = vrot.lane.b32.xlu0 %v459, 127
        %v480 = vpop.permute.xlu0 %479
        %481 = vrot.lane.b32.xlu0 %v461, 127
        %v482 = vpop.permute.xlu0 %481
        %vm483 = vcmp.lt.s32.totalorder %v322, 127
        %v484 = vsel %vm483, %v476, %v480
        %v485 = vsel %vm483, %v478, %v482
        %v486 = vsel %vm483, %v480, %v476
        %v487 = vsel %vm483, %v482, %v478
        %v488 = vmul.f32 %v473, %v339
        %v489 = vmul.f32 %v471, %v340
        %v490 = vmul.f32 %v474, %v339
        %v491 = vmul.f32 %v472, %v340
        %v492 = vadd.f32 %v458, %v488
        %v493 = vadd.f32 %v459, %v489
        %v494 = vadd.f32 %v460, %v490
        %v495 = vadd.f32 %v461, %v491
        %v496 = vmul.f32 %v484, %v345
        %v497 = vmul.f32 %v486, %v346
        %v498 = vmul.f32 %v485, %v345
        %v499 = vmul.f32 %v487, %v346
        %v500 = vadd.f32 %v492, %v496
        %v501 = vadd.f32 %v493, %v497
        %v502 = vadd.f32 %v494, %v498
        %v503 = vadd.f32 %v495, %v499
        %v504 = vmul.f32 %v500, 0.11111111
        %v505 = vmul.f32 %v501, 0.11111111
        %v506 = vmul.f32 %v502, 0.11111111
        %v507 = vmul.f32 %v503, 0.11111111
        %v508 = vsub.f32 %v363, %v504
        %v509 = vsub.f32 %v364, %v505
        %v510 = vsub.f32 %v365, %v506
        %v511 = vsub.f32 %v366, %v507
        %v512 = vmul.f32 %v508, %v508
        %v513 = vmul.f32 %v509, %v509
        %v514 = vmul.f32 %v510, %v510
        %v515 = vmul.f32 %v511, %v511
        %v516 = vmul.f32 %v512, %v313
        %v517 = vmul.f32 %v513, %v314
        %v518 = vmul.f32 %v514, %v315
        %v519 = vmul.f32 %v515, %v316
        %v520 = vadd.f32 %v516, %v517
        %v521 = vadd.f32 %v520, %v518
        %v522 = vadd.f32 %v521, %v519
        %523 = vadd.xlane.f32.xlu0 %v522
        %v524 = vpop.xlane.xlu0 %523
        %v525 = vrot.slane %v524, 4
        %v526 = vadd.f32 %v524, %v525
        %v527 = vrot.slane %v526, 2
        %v528 = vadd.f32 %v526, %v527
        %v529 = vrot.slane %v528, 1
        %v530 = vadd.f32 %v528, %v529
        %s531 = vtos %v530
        %s532 = sadd.f32 %s531, 0.0
        %s533 = sld [smem:[#allocation2 + $0x80]]
        %s534 = sld [smem:[#allocation2 + $0x81]]
        %s535 = sld [smem:[#allocation2 + $0x82]]
        %v536 = vstv %s533
        %v537 = vmul.f32 %v536, %v324
        %v538 = vmul.f32 %v536, %v325
        %v539 = vstv %s534
        %v540 = vmul.f32 %v539, %v329
        %v541 = vmul.f32 %v539, %v330
        %v542 = vstv %s535
        %v543 = vadd.f32 %v540, %v542
        %v544 = vadd.f32 %v541, %v542
        %v545 = vadd.f32 %v537, %v543
        %v546 = vadd.f32 %v538, %v543
        %v547 = vadd.f32 %v537, %v544
        %v548 = vadd.f32 %v538, %v544
        %v549 = vmul.f32 %v545, %v309
        %v550 = vmul.f32 %v546, %v310
        %v551 = vmul.f32 %v547, %v311
        %v552 = vmul.f32 %v548, %v312
        %s553 = smul.f32 %s534, %s367
        %s554 = sadd.f32 %s553, %s535
        %v555 = vstv %s554
        %v556 = vadd.f32 %v537, %v555
        %v557 = vadd.f32 %v538, %v555
        %v558 = vmul.f32 %v556, %v377
        %v559 = vmul.f32 %v557, %v381
        %s560 = smul.f32 %s534, %s386
        %s561 = sadd.f32 %s560, %s535
        %v562 = vstv %s561
        %v563 = vadd.f32 %v537, %v562
        %v564 = vadd.f32 %v538, %v562
        %v565 = vmul.f32 %v563, %v395
        %v566 = vmul.f32 %v564, %v399
        %v567 = vrot.slane %v549, 7
        %v568 = vrot.slane %v550, 7
        %v569 = vrot.slane %v551, 7
        %v570 = vrot.slane %v552, 7
        %v571 = vsel %vm408, %v567, %v569
        %v572 = vsel %vm408, %v568, %v570
        %v573 = vsel %vm408, %v569, %v567
        %v574 = vsel %vm408, %v570, %v568
        %v575 = vrot.slane %v549, 1
        %v576 = vrot.slane %v550, 1
        %v577 = vrot.slane %v551, 1
        %v578 = vrot.slane %v552, 1
        %v579 = vsel %vm417, %v575, %v577
        %v580 = vsel %vm417, %v576, %v578
        %v581 = vsel %vm417, %v577, %v575
        %v582 = vsel %vm417, %v578, %v576
        %v583 = vlaneseq
        %v584 = vshrl.u32 %v583, 7
        %v585 = vsub.s32 0, %v584
        %v586 = vrot.slane %v558, %v585
        %v587 = vlaneseq
        %v588 = vshrl.u32 %v587, 7
        %v589 = vsub.s32 0, %v588
        %v590 = vrot.slane %v559, %v589
        %v591 = vsel %vm424, %v586, %v573
        %v592 = vsel %vm424, %v590, %v574
        %v593 = vsel %vm425, %v586, %v571
        %v594 = vsel %vm425, %v590, %v572
        %v595 = vadd.f32 %v549, %v591
        %v596 = vadd.f32 %v550, %v592
        %v597 = vadd.f32 %v551, %v593
        %v598 = vadd.f32 %v552, %v594
        %v599 = vlaneseq
        %v600 = vshrl.u32 %v599, 7
        %v601 = vsub.s32 0, %v600
        %v602 = vrot.slane %v565, %v601
        %v603 = vlaneseq
        %v604 = vshrl.u32 %v603, 7
        %v605 = vsub.s32 0, %v604
        %v606 = vrot.slane %v566, %v605
        %v607 = vsel %vm444, %v602, %v579
        %v608 = vsel %vm444, %v606, %v580
        %v609 = vsel %vm445, %v602, %v581
        %v610 = vsel %vm445, %v606, %v582
        %v611 = vadd.f32 %v595, %v607
        %v612 = vadd.f32 %v596, %v608
        %v613 = vadd.f32 %v597, %v609
        %v614 = vadd.f32 %v598, %v610
        %615 = vrot.lane.b32.xlu0 %v611, 1
        %v616 = vpop.permute.xlu0 %615
        %617 = vrot.lane.b32.xlu0 %v613, 1
        %v618 = vpop.permute.xlu0 %617
        %619 = vrot.lane.b32.xlu0 %v612, 1
        %v620 = vpop.permute.xlu0 %619
        %621 = vrot.lane.b32.xlu0 %v614, 1
        %v622 = vpop.permute.xlu0 %621
        %v623 = vsel %vm470, %v616, %v620
        %v624 = vsel %vm470, %v618, %v622
        %v625 = vsel %vm470, %v620, %v616
        %v626 = vsel %vm470, %v622, %v618
        %627 = vrot.lane.b32.xlu0 %v611, 127
        %v628 = vpop.permute.xlu0 %627
        %629 = vrot.lane.b32.xlu0 %v613, 127
        %v630 = vpop.permute.xlu0 %629
        %631 = vrot.lane.b32.xlu0 %v612, 127
        %v632 = vpop.permute.xlu0 %631
        %633 = vrot.lane.b32.xlu0 %v614, 127
        %v634 = vpop.permute.xlu0 %633
        %v635 = vsel %vm483, %v628, %v632
        %v636 = vsel %vm483, %v630, %v634
        %v637 = vsel %vm483, %v632, %v628
        %v638 = vsel %vm483, %v634, %v630
        %v639 = vmul.f32 %v625, %v339
        %v640 = vmul.f32 %v623, %v340
        %v641 = vmul.f32 %v626, %v339
        %v642 = vmul.f32 %v624, %v340
        %v643 = vadd.f32 %v611, %v639
        %v644 = vadd.f32 %v612, %v640
        %v645 = vadd.f32 %v613, %v641
        %v646 = vadd.f32 %v614, %v642
        %v647 = vmul.f32 %v635, %v345
        %v648 = vmul.f32 %v637, %v346
        %v649 = vmul.f32 %v636, %v345
        %v650 = vmul.f32 %v638, %v346
        %v651 = vadd.f32 %v643, %v647
        %v652 = vadd.f32 %v644, %v648
        %v653 = vadd.f32 %v645, %v649
        %v654 = vadd.f32 %v646, %v650
        %v655 = vmul.f32 %v651, 0.11111111
        %v656 = vmul.f32 %v652, 0.11111111
        %v657 = vmul.f32 %v653, 0.11111111
        %v658 = vmul.f32 %v654, 0.11111111
        %v659 = vsub.f32 %v549, %v655
        %v660 = vsub.f32 %v550, %v656
        %v661 = vsub.f32 %v551, %v657
        %v662 = vsub.f32 %v552, %v658
        %v663 = vmul.f32 %v659, %v659
        %v664 = vmul.f32 %v660, %v660
        %v665 = vmul.f32 %v661, %v661
        %v666 = vmul.f32 %v662, %v662
        %v667 = vmul.f32 %v663, %v313
        %v668 = vmul.f32 %v664, %v314
        %v669 = vmul.f32 %v665, %v315
        %v670 = vmul.f32 %v666, %v316
        %v671 = vadd.f32 %v667, %v668
        %v672 = vadd.f32 %v671, %v669
        %v673 = vadd.f32 %v672, %v670
        %674 = vadd.xlane.f32.xlu0 %v673
        %v675 = vpop.xlane.xlu0 %674
        %v676 = vrot.slane %v675, 4
        %v677 = vadd.f32 %v675, %v676
        %v678 = vrot.slane %v677, 2
        %v679 = vadd.f32 %v677, %v678
        %v680 = vrot.slane %v679, 1
        %v681 = vadd.f32 %v679, %v680
        %s682 = vtos %v681
        %s683 = sadd.f32 %s532, %s682
        %s684 = sld [smem:[#allocation2 + $0x100]]
        %s685 = sld [smem:[#allocation2 + $0x101]]
        %s686 = sld [smem:[#allocation2 + $0x102]]
        %v687 = vstv %s684
        %v688 = vmul.f32 %v687, %v324
        %v689 = vmul.f32 %v687, %v325
        %v690 = vstv %s685
        %v691 = vmul.f32 %v690, %v329
        %v692 = vmul.f32 %v690, %v330
        %v693 = vstv %s686
        %v694 = vadd.f32 %v691, %v693
        %v695 = vadd.f32 %v692, %v693
        %v696 = vadd.f32 %v688, %v694
        %v697 = vadd.f32 %v689, %v694
        %v698 = vadd.f32 %v688, %v695
        %v699 = vadd.f32 %v689, %v695
        %v700 = vmul.f32 %v696, %v309
        %v701 = vmul.f32 %v697, %v310
        %v702 = vmul.f32 %v698, %v311
        %v703 = vmul.f32 %v699, %v312
        %s704 = smul.f32 %s685, %s367
        %s705 = sadd.f32 %s704, %s686
        %v706 = vstv %s705
        %v707 = vadd.f32 %v688, %v706
        %v708 = vadd.f32 %v689, %v706
        %v709 = vmul.f32 %v707, %v377
        %v710 = vmul.f32 %v708, %v381
        %s711 = smul.f32 %s685, %s386
        %s712 = sadd.f32 %s711, %s686
        %v713 = vstv %s712
        %v714 = vadd.f32 %v688, %v713
        %v715 = vadd.f32 %v689, %v713
        %v716 = vmul.f32 %v714, %v395
        %v717 = vmul.f32 %v715, %v399
        %v718 = vrot.slane %v700, 7
        %v719 = vrot.slane %v701, 7
        %v720 = vrot.slane %v702, 7
        %v721 = vrot.slane %v703, 7
        %v722 = vsel %vm408, %v718, %v720
        %v723 = vsel %vm408, %v719, %v721
        %v724 = vsel %vm408, %v720, %v718
        %v725 = vsel %vm408, %v721, %v719
        %v726 = vrot.slane %v700, 1
        %v727 = vrot.slane %v701, 1
        %v728 = vrot.slane %v702, 1
        %v729 = vrot.slane %v703, 1
        %v730 = vsel %vm417, %v726, %v728
        %v731 = vsel %vm417, %v727, %v729
        %v732 = vsel %vm417, %v728, %v726
        %v733 = vsel %vm417, %v729, %v727
        %v734 = vlaneseq
        %v735 = vshrl.u32 %v734, 7
        %v736 = vsub.s32 0, %v735
        %v737 = vrot.slane %v709, %v736
        %v738 = vlaneseq
        %v739 = vshrl.u32 %v738, 7
        %v740 = vsub.s32 0, %v739
        %v741 = vrot.slane %v710, %v740
        %v742 = vsel %vm424, %v737, %v724
        %v743 = vsel %vm424, %v741, %v725
        %v744 = vsel %vm425, %v737, %v722
        %v745 = vsel %vm425, %v741, %v723
        %v746 = vadd.f32 %v700, %v742
        %v747 = vadd.f32 %v701, %v743
        %v748 = vadd.f32 %v702, %v744
        %v749 = vadd.f32 %v703, %v745
        %v750 = vlaneseq
        %v751 = vshrl.u32 %v750, 7
        %v752 = vsub.s32 0, %v751
        %v753 = vrot.slane %v716, %v752
        %v754 = vlaneseq
        %v755 = vshrl.u32 %v754, 7
        %v756 = vsub.s32 0, %v755
        %v757 = vrot.slane %v717, %v756
        %v758 = vsel %vm444, %v753, %v730
        %v759 = vsel %vm444, %v757, %v731
        %v760 = vsel %vm445, %v753, %v732
        %v761 = vsel %vm445, %v757, %v733
        %v762 = vadd.f32 %v746, %v758
        %v763 = vadd.f32 %v747, %v759
        %v764 = vadd.f32 %v748, %v760
        %v765 = vadd.f32 %v749, %v761
        %766 = vrot.lane.b32.xlu0 %v762, 1
        %v767 = vpop.permute.xlu0 %766
        %768 = vrot.lane.b32.xlu0 %v764, 1
        %v769 = vpop.permute.xlu0 %768
        %770 = vrot.lane.b32.xlu0 %v763, 1
        %v771 = vpop.permute.xlu0 %770
        %772 = vrot.lane.b32.xlu0 %v765, 1
        %v773 = vpop.permute.xlu0 %772
        %v774 = vsel %vm470, %v767, %v771
        %v775 = vsel %vm470, %v769, %v773
        %v776 = vsel %vm470, %v771, %v767
        %v777 = vsel %vm470, %v773, %v769
        %778 = vrot.lane.b32.xlu0 %v762, 127
        %v779 = vpop.permute.xlu0 %778
        %780 = vrot.lane.b32.xlu0 %v764, 127
        %v781 = vpop.permute.xlu0 %780
        %782 = vrot.lane.b32.xlu0 %v763, 127
        %v783 = vpop.permute.xlu0 %782
        %784 = vrot.lane.b32.xlu0 %v765, 127
        %v785 = vpop.permute.xlu0 %784
        %v786 = vsel %vm483, %v779, %v783
        %v787 = vsel %vm483, %v781, %v785
        %v788 = vsel %vm483, %v783, %v779
        %v789 = vsel %vm483, %v785, %v781
        %v790 = vmul.f32 %v776, %v339
        %v791 = vmul.f32 %v774, %v340
        %v792 = vmul.f32 %v777, %v339
        %v793 = vmul.f32 %v775, %v340
        %v794 = vadd.f32 %v762, %v790
        %v795 = vadd.f32 %v763, %v791
        %v796 = vadd.f32 %v764, %v792
        %v797 = vadd.f32 %v765, %v793
        %v798 = vmul.f32 %v786, %v345
        %v799 = vmul.f32 %v788, %v346
        %v800 = vmul.f32 %v787, %v345
        %v801 = vmul.f32 %v789, %v346
        %v802 = vadd.f32 %v794, %v798
        %v803 = vadd.f32 %v795, %v799
        %v804 = vadd.f32 %v796, %v800
        %v805 = vadd.f32 %v797, %v801
        %v806 = vmul.f32 %v802, 0.11111111
        %v807 = vmul.f32 %v803, 0.11111111
        %v808 = vmul.f32 %v804, 0.11111111
        %v809 = vmul.f32 %v805, 0.11111111
        %v810 = vsub.f32 %v700, %v806
        %v811 = vsub.f32 %v701, %v807
        %v812 = vsub.f32 %v702, %v808
        %v813 = vsub.f32 %v703, %v809
        %v814 = vmul.f32 %v810, %v810
        %v815 = vmul.f32 %v811, %v811
        %v816 = vmul.f32 %v812, %v812
        %v817 = vmul.f32 %v813, %v813
        %v818 = vmul.f32 %v814, %v313
        %v819 = vmul.f32 %v815, %v314
        %v820 = vmul.f32 %v816, %v315
        %v821 = vmul.f32 %v817, %v316
        %v822 = vadd.f32 %v818, %v819
        %v823 = vadd.f32 %v822, %v820
        %v824 = vadd.f32 %v823, %v821
        %825 = vadd.xlane.f32.xlu0 %v824
        %v826 = vpop.xlane.xlu0 %825
        %v827 = vrot.slane %v826, 4
        %v828 = vadd.f32 %v826, %v827
        %v829 = vrot.slane %v828, 2
        %v830 = vadd.f32 %v828, %v829
        %v831 = vrot.slane %v830, 1
        %v832 = vadd.f32 %v830, %v831
        %s833 = vtos %v832
        %s834 = sadd.f32 %s683, %s833
        %v835 = vstv %s834
        %836 = vst [vmem:[%s304] sm:$0xff] %v835
        %s837 = sand.u32 %s132, 1
        %s838 = scalar_lea.sflag [#allocation4], %s837
        %s839 = sand.u32 %s132, 1
        %s840 = smul.addr %s839, 8
        %s841 = scalar_lea.vmem [#allocation10], %s840
        // Predicated region
        $region53: #{tpu_custom_call.1} parent=35 // pred_check
          %p842 = pneg %p142
        $region54: #{tpu_custom_call.1} parent=35 // pred_check_branch
          %844 = sbr.rel (%p842) target = $region56
        $region55: #{tpu_custom_call.1} parent=35 // pred_region
          %s846 = ssub.s32 128, 128
          %847 = vsyncadd %s838, %s846
          %s848 = smul.addr %s25, 128
          %s849 = scalar_lea.hbm %s4, %s848
          %s851 = sshll.u32 %s841, 4
          %s852 = int_to_ptr.vmem [resolvable:$true] %s851
          %854 = dma.vmem_to_hbm [thread:$0]  %s852, 128, %s849, %s838
        $region56: #{tpu_custom_call.1} parent=35 // pred_fallthru
          _
      $region36: #{tpu_custom_call.1} parent=5 // pred_fallthru
        _
      %p855 = scmp.le.s32.totalorder 2, %s20
      // Predicated region
      $region57: #{tpu_custom_call.1} parent=5 // pred_check
        %p856 = pneg %p855
      $region58: #{tpu_custom_call.1} parent=5 // pred_check_branch
        %858 = sbr.rel (%p856) target = $region60
      $region59: #{tpu_custom_call.1} parent=5 // pred_region
        %s859 = ssub.s32 %s20, 2
        // Predicated region
        $region61: #{tpu_custom_call.1} parent=59 // pred_check
          %p860 = pneg %p148
        $region62: #{tpu_custom_call.1} parent=59 // pred_check_branch
          %862 = sbr.rel (%p860) target = $region64
        $region63: #{tpu_custom_call.1} parent=59 // pred_region
          %s863 = sand.u32 %s133, 1
          %s864 = scalar_lea.sflag [#allocation4], %s863
          %s865 = sand.u32 %s133, 1
          %s866 = smul.addr %s865, 8
          %s867 = scalar_lea.vmem [#allocation10], %s866
          %868 = dma.done %s864, 128
        $region64: #{tpu_custom_call.1} parent=59 // pred_fallthru
          _
      $region60: #{tpu_custom_call.1} parent=5 // pred_fallthru
        _
    $region6: #{tpu_custom_call.1} parent=1 // loop_footer
      %s24 = sadd.s32 1, %s20
    $region7: #{tpu_custom_call.1} parent=1 // loop_footer_branch
      %19 = sbr.rel target = $region3
    $region8: #{tpu_custom_call.1} parent=1 // loop_exit
      _
    %869 = vsyncpa [#allocation3], 1
    %s870 = scalar_lea.sflag [#allocation3], 1
    %871 = vsyncpa %s870, 1
    %872 = vsyncpa [#allocation8], 1
    %s873 = scalar_lea.sflag [#allocation8], 1
    %874 = vsyncpa %s873, 1
    %875 = vsyncpa [#allocation4], 1
    %s876 = scalar_lea.sflag [#allocation4], 1
    %877 = vsyncpa %s876, 1
    %878 = vsyncpa [#allocation5], 1
    %s879 = scalar_lea.sflag [#allocation5], 1
    %880 = vsyncpa %s879, 1

</llo_original>
